<compile_context>
chip_gen: v6e
topology: v6e:2x2x1
jax: 0.10.0
libtpu: 0.0.40
codegen_flags: <defaults>
</compile_context>

<pallas_src>
import jax
import jax.numpy as jnp
from jax.experimental import pallas as pl
from jax.experimental.pallas import tpu as pltpu


def _round_up(v, m):
    return (v + m - 1) // m * m


def mlp_kernel(x_ref, w12_ref, b12_ref, w3_ref, b3_ref, o_ref):
    # Fused linear1+linear2, then clamp(min=0) == ReLU, then linear3.
    h = jnp.dot(x_ref[...], w12_ref[...], preferred_element_type=jnp.float32)
    h = jnp.maximum(h + b12_ref[...], 0.0)
    out = jnp.dot(h, w3_ref[...], preferred_element_type=jnp.float32)
    o_ref[...] = (out + b3_ref[...]).astype(o_ref.dtype)


def fuse_params(params):
    """One-time, init-time fusion of linear1+linear2 (no activation between them).
    Do this once and keep the fused params around; never per forward call."""
    w1t, b1, w2t, b2, w3t, b3 = params
    w12 = (w1t.astype(jnp.float32) @ w2t.astype(jnp.float32)).astype(w1t.dtype)
    b12 = (b1.astype(jnp.float32) @ w2t.astype(jnp.float32)
           + b2.astype(jnp.float32)).astype(b1.dtype)
    return (w12, b12, w3t, b3)


def my_neural_net_forward(x, fused_params, *, tm_pref=1024):
    """Forward pass. `fused_params` = (w12 (D_in,H), b12 (1,H), w3t (H,D_out), b3 (1,D_out))."""
    w12, b12, w3t, b3 = fused_params
    n, d_in = x.shape
    h = w12.shape[1]
    d_out = w3t.shape[1]

    # Batch tile: multiple of 8 (f32 sublane tiling). Large tiles amortize
    # per-grid-step overhead; for big batches cap tm so there are >= 2 grid
    # steps and the "parallel" axis can shard across v7x's two TensorCores.
    n8 = _round_up(max(n, 8), 8)
    if n8 > tm_pref:
        tm = min(tm_pref, _round_up(pl.cdiv(n8, 2), 8))
    else:
        tm = n8
    tm = max(8, (tm // 8) * 8)
    n_pad = _round_up(n, tm)

    # Only the batch axis is (cheaply, 8-row granularity) padded. Feature dims
    # keep their real widths so DMAs move only real bytes.
    if n_pad != n:
        x_in = jnp.zeros((n_pad, d_in), x.dtype).at[:n, :].set(x)
    else:
        x_in = x

    const = lambda i: (0, 0)  # whole-array blocks: VMEM-resident across steps

    out = pl.pallas_call(
        mlp_kernel,
        out_shape=jax.ShapeDtypeStruct((n_pad, d_out), x.dtype),
        grid=(n_pad // tm,),
        in_specs=[
            pl.BlockSpec((tm, d_in), lambda i: (i, 0)),   # x: tiled over batch
            pl.BlockSpec((d_in, h), const),               # fused W12
            pl.BlockSpec((1, h), const),                  # fused b12
            pl.BlockSpec((h, d_out), const),              # W3
            pl.BlockSpec((1, d_out), const),              # b3
        ],
        out_specs=pl.BlockSpec((tm, d_out), lambda i: (i, 0)),
        compiler_params=pltpu.CompilerParams(
            dimension_semantics=("parallel",)),           # 2 TCs on v7x
    )(x_in, w12, b12, w3t, b3)

    return out[:n] if n_pad != n else out


def init_params(key, d_in, h, d_out, dtype=jnp.float32):
    """Init mimicking torch.nn.Linear default (uniform +/- 1/sqrt(fan_in)).
    Weights stored transposed (in_features, out_features); biases (1, out_features)."""
    ks = jax.random.split(key, 6)

    def lin(kw, kb, fan_in, fan_out):
        bound = 1.0 / (fan_in ** 0.5)
        w_t = jax.random.uniform(kw, (fan_in, fan_out), dtype, -bound, bound)
        b = jax.random.uniform(kb, (1, fan_out), dtype, -bound, bound)
        return w_t, b

    w1t, b1 = lin(ks[0], ks[1], d_in, h)
    w2t, b2 = lin(ks[2], ks[3], h, h)
    w3t, b3 = lin(ks[4], ks[5], h, d_out)
    return (w1t, b1, w2t, b2, w3t, b3)


if __name__ == "__main__":
    # Shapes implied by the module's data prep: D_in = 1 + 20 = 21 features,
    # batch N = 10 (the module's random batch choice), hidden H = 32,
    # D_out = 3 (predicted forces).
    # TODO(synk): the file-reading / numpy dataset prep in the original script
    # (file_len, 1akq_angles+names.txt) is host-side data loading, not part of
    # the forward pass, and is not translated.
    N_BATCH, D_IN, H, D_OUT = 10, 21, 32, 3

    key = jax.random.PRNGKey(0)
    k_x, k_p = jax.random.split(key)
    x = jax.random.normal(k_x, (N_BATCH, D_IN), dtype=jnp.float32)
    params = init_params(k_p, D_IN, H, D_OUT)
    fused = fuse_params(params)          # one-time prep, outside the hot path

    out = my_neural_net_forward(x, fused)
    jax.block_until_ready(out)

    # Pure-JAX reference, computed the *unfused* way (as in the PyTorch module).
    w1t, b1, w2t, b2, w3t, b3 = params
    ref = jnp.maximum((x @ w1t + b1) @ w2t + b2, 0.0) @ w3t + b3
    assert out.shape == (N_BATCH, D_OUT)
    # Fusion changes f32 summation order -> slightly looser tolerance.
    assert jnp.allclose(out, ref, atol=1e-4, rtol=1e-4)

    print("KERNEL_OK")
</pallas_src>

<mosaic_0001>
module attributes {stable_mosaic.version = 11 : i64} {
  func.func @mlp_kernel(%arg0: i32, %arg1: memref<16x21xf32, #tpu.memory_space<vmem>>, %arg2: memref<21x32xf32, #tpu.memory_space<vmem>>, %arg3: memref<1x32xf32, #tpu.memory_space<vmem>>, %arg4: memref<32x3xf32, #tpu.memory_space<vmem>>, %arg5: memref<1x3xf32, #tpu.memory_space<vmem>>, %arg6: memref<16x3xf32, #tpu.memory_space<vmem>>) attributes {dimension_semantics = [#tpu.dimension_semantics<parallel>], iteration_bounds = array<i64: 1>, scalar_prefetch = 0 : i64, scratch_operands = 0 : i64, tpu.core_type = #tpu.core_type<tc>, window_params = [{transform_indices = @transform_0, window_bounds = array<i64: 16, 21>}, {pipeline_mode = #tpu.pipeline_mode<synchronous>, transform_indices = @transform_1, window_bounds = array<i64: 21, 32>}, {pipeline_mode = #tpu.pipeline_mode<synchronous>, transform_indices = @transform_2, window_bounds = array<i64: 1, 32>}, {pipeline_mode = #tpu.pipeline_mode<synchronous>, transform_indices = @transform_3, window_bounds = array<i64: 32, 3>}, {pipeline_mode = #tpu.pipeline_mode<synchronous>, transform_indices = @transform_4, window_bounds = array<i64: 1, 3>}, {transform_indices = @transform_5, window_bounds = array<i64: 16, 3>}]} {
    %c0 = arith.constant 0 : index
    %c0_0 = arith.constant 0 : index
    %0 = vector.load %arg1[%c0, %c0_0] : memref<16x21xf32, #tpu.memory_space<vmem>>, vector<16x21xf32>
    %c0_1 = arith.constant 0 : index
    %c0_2 = arith.constant 0 : index
    %1 = vector.load %arg2[%c0_1, %c0_2] : memref<21x32xf32, #tpu.memory_space<vmem>>, vector<21x32xf32>
    %cst = arith.constant dense<0.000000e+00> : vector<16x32xf32>
    %2 = tpu.matmul %0, %1, %cst {dimension_numbers = #tpu.dot_dimension_numbers<[1], [0], [0], [1], [0, 0, 1, 1], [], []>} : vector<16x21xf32>, vector<21x32xf32>, vector<16x32xf32> -> vector<16x32xf32>
    %c0_3 = arith.constant 0 : index
    %c0_4 = arith.constant 0 : index
    %3 = vector.load %arg3[%c0_3, %c0_4] : memref<1x32xf32, #tpu.memory_space<vmem>>, vector<1x32xf32>
    %4 = vector.broadcast %3 : vector<1x32xf32> to vector<16x32xf32>
    %5 = arith.addf %2, %4 : vector<16x32xf32>
    %cst_5 = arith.constant 0.000000e+00 : f32
    %6 = vector.broadcast %cst_5 : f32 to vector<16x32xf32>
    %7 = arith.maximumf %5, %6 : vector<16x32xf32>
    %c0_6 = arith.constant 0 : index
    %c0_7 = arith.constant 0 : index
    %8 = vector.load %arg4[%c0_6, %c0_7] : memref<32x3xf32, #tpu.memory_space<vmem>>, vector<32x3xf32>
    %cst_8 = arith.constant dense<0.000000e+00> : vector<16x3xf32>
    %9 = tpu.matmul %7, %8, %cst_8 {dimension_numbers = #tpu.dot_dimension_numbers<[1], [0], [0], [1], [0, 0, 1, 1], [], []>} : vector<16x32xf32>, vector<32x3xf32>, vector<16x3xf32> -> vector<16x3xf32>
    %c0_9 = arith.constant 0 : index
    %c0_10 = arith.constant 0 : index
    %10 = vector.load %arg5[%c0_9, %c0_10] : memref<1x3xf32, #tpu.memory_space<vmem>>, vector<1x3xf32>
    %11 = vector.broadcast %10 : vector<1x3xf32> to vector<16x3xf32>
    %12 = arith.addf %9, %11 : vector<16x3xf32>
    %c0_11 = arith.constant 0 : index
    %c0_12 = arith.constant 0 : index
    %13 = vector.load %arg6[%c0_11, %c0_12] : memref<16x3xf32, #tpu.memory_space<vmem>>, vector<16x3xf32>
    tpu.vector_store %arg6[%c0_11, %c0_12], %12 {strides = array<i32>} : memref<16x3xf32, #tpu.memory_space<vmem>>, vector<16x3xf32>,
    return
  }
  func.func @transform_0(%arg0: i32) -> (i32, i32) {
    %c0_i32 = arith.constant 0 : i32
    %c0_i32_0 = arith.constant 0 : i32
    return %arg0, %c0_i32 : i32, i32
  }
  func.func @transform_1(%arg0: i32) -> (i32, i32) {
    %c0_i32 = arith.constant 0 : i32
    %c0_i32_0 = arith.constant 0 : i32
    %c0_i32_1 = arith.constant 0 : i32
    return %c0_i32, %c0_i32_0 : i32, i32
  }
  func.func @transform_2(%arg0: i32) -> (i32, i32) {
    %c0_i32 = arith.constant 0 : i32
    %c0_i32_0 = arith.constant 0 : i32
    %c0_i32_1 = arith.constant 0 : i32
    return %c0_i32, %c0_i32_0 : i32, i32
  }
  func.func @transform_3(%arg0: i32) -> (i32, i32) {
    %c0_i32 = arith.constant 0 : i32
    %c0_i32_0 = arith.constant 0 : i32
    %c0_i32_1 = arith.constant 0 : i32
    return %c0_i32, %c0_i32_0 : i32, i32
  }
  func.func @transform_4(%arg0: i32) -> (i32, i32) {
    %c0_i32 = arith.constant 0 : i32
    %c0_i32_0 = arith.constant 0 : i32
    %c0_i32_1 = arith.constant 0 : i32
    return %c0_i32, %c0_i32_0 : i32, i32
  }
  func.func @transform_5(%arg0: i32) -> (i32, i32) {
    %c0_i32 = arith.constant 0 : i32
    %c0_i32_0 = arith.constant 0 : i32
    return %arg0, %c0_i32 : i32, i32
  }
}

</mosaic_0001>

<llo_original>
// kernel: tpu_custom_call.1
$region0: #{tpu_custom_call.1}
  #allocation0 [shape = 'u32[]', space=smem, size = 0x4, offset = 0x4, fixed_abs, tag = 'smem constant byte address 0x4 - core index']
  #allocation1 [shape = 'u32[144,128]{1,0:T(1,128)}', space=vmem, size = 0x12000, scoped, tag = 'internal scratch']
  %s0 = inlined_call_operand.hbm [shape: f32[16,21], index: 0, kind: input, shape index: {}]
  %s1 = inlined_call_operand.vmem [shape: f32[21,32], index: 1, kind: input, shape index: {}]
  %s2 = inlined_call_operand.vmem [shape: f32[1,32], index: 2, kind: input, shape index: {}]
  %s3 = inlined_call_operand.vmem [shape: f32[32,3], index: 3, kind: input, shape index: {}]
  %s4 = inlined_call_operand.vmem [shape: f32[1,3], index: 4, kind: input, shape index: {}]
  %s5 = inlined_call_operand.vmem [shape: f32[16,3], index: 5, kind: output, shape index: {}]
  %s6 = sld [smem:[#allocation0]]
  $region34: #{tpu_custom_call.1} parent=0
    _
  %s8 = ssub.s32 1, %s6
  %s9 = scalar_select 0, %s8, %s6
  $region1: #{tpu_custom_call.1} parent=0
    #allocation2 [shape = 'u8[8192]{0}', space=vmem, size = 0x2000, scoped, tag = 'input window, operand 0, single buffered']
    #allocation3 [shape = 's32[1]{0}', space=sflag, size = 0x4, scoped, tag = 'scoped memory for tpu_custom_call.1']
    %10 = vsyncpa [#allocation3], 0
    // Predicated region
    $region2: #{tpu_custom_call.1} parent=1 // pred_check
      _
    $region3: #{tpu_custom_call.1} parent=1 // pred_check_branch
      %12 = sbr.rel (0) target = $region5
    $region4: #{tpu_custom_call.1} parent=1 // pred_region
      %s14 = ssub.s32 256, 256
      %15 = vsyncadd [#allocation3], %s14
      %s16 = sshll.u32 [#allocation2], 4
      %s17 = int_to_ptr.vmem [resolvable:$true] %s16
      %22 = dma.hbm_to_vmem [thread:$0]  %s0, 256, %s17, [#allocation3], 128, 128, 8
    $region5: #{tpu_custom_call.1} parent=1 // pred_fallthru
      _
    // Predicated region
    $region6: #{tpu_custom_call.1} parent=1 // pred_check
      _
    $region7: #{tpu_custom_call.1} parent=1 // pred_check_branch
      %24 = sbr.rel (0) target = $region9
    $region8: #{tpu_custom_call.1} parent=1 // pred_region
      _
    $region9: #{tpu_custom_call.1} parent=1 // pred_fallthru
      _
    // Predicated region
    $region10: #{tpu_custom_call.1} parent=1 // pred_check
      _
    $region11: #{tpu_custom_call.1} parent=1 // pred_check_branch
      %26 = sbr.rel (0) target = $region13
    $region12: #{tpu_custom_call.1} parent=1 // pred_region
      _
    $region13: #{tpu_custom_call.1} parent=1 // pred_fallthru
      _
    // Predicated region
    $region14: #{tpu_custom_call.1} parent=1 // pred_check
      _
    $region15: #{tpu_custom_call.1} parent=1 // pred_check_branch
      %28 = sbr.rel (0) target = $region17
    $region16: #{tpu_custom_call.1} parent=1 // pred_region
      _
    $region17: #{tpu_custom_call.1} parent=1 // pred_fallthru
      _
    // Predicated region
    $region18: #{tpu_custom_call.1} parent=1 // pred_check
      _
    $region19: #{tpu_custom_call.1} parent=1 // pred_check_branch
      %30 = sbr.rel (0) target = $region21
    $region20: #{tpu_custom_call.1} parent=1 // pred_region
      _
    $region21: #{tpu_custom_call.1} parent=1 // pred_fallthru
      _
    // Predicated region
    $region22: #{tpu_custom_call.1} parent=1 // pred_check
      _
    $region23: #{tpu_custom_call.1} parent=1 // pred_check_branch
      %32 = sbr.rel (0) target = $region25
    $region24: #{tpu_custom_call.1} parent=1 // pred_region
      %33 = dma.done [#allocation3], 256
    $region25: #{tpu_custom_call.1} parent=1 // pred_fallthru
      _
    %v34 = vld [vmem:[#allocation2] sm:$0xff]
    %v35 = vld [vmem:[#allocation2 + $0x8] sm:$0xff]
    %v36 = vld [vmem:[%s1] sm:$0xff]
    %v37 = vld [vmem:[%s1 + $0x8] sm:$0xff]
    %v38 = vld [vmem:[%s1 + $0x10] sm:$0x1f]
    %v39 = vld [vmem:[%s2] sm:$0x1]
    %v41 = vlaneseq
    %v42 = vshrl.u32 %v41, 7
    %v43 = vsub.s32 0, %v42
    %v44 = vrot.slane %v39, %v43
    %vm46 = vcmask 171008
    %v48 = vsel %vm46, %v34, 0
    %v51 = vsel %vm46, %v35, 0
    %vm53 = vcmask 1044480
    %v55 = vsel %vm53, %v38, 0
    %57 = vmatprep.subr.mxu0 0.0
    %58 = vmatpush1.msra.mxu0 0.0
    %59 = vmatprep.subr.mxu0 0.0
    %60 = vmatpush1.msra.mxu0 0.0
    %61 = vmatprep.subr.mxu0 0.0
    %62 = vmatpush1.msra.mxu0 0.0
    %63 = vmatprep.subr.mxu0 0.0
    %64 = vmatpush1.msra.mxu0 0.0
    %65 = vmatprep.subr.mxu0 0.0
    %66 = vmatpush1.msra.mxu0 0.0
    %67 = vmatprep.subr.mxu0 0.0
    %68 = vmatpush1.msra.mxu0 0.0
    %69 = vmatprep.subr.mxu0 0.0
    %70 = vmatpush1.msra.mxu0 0.0
    %71 = vmatprep.subr.mxu0 0.0
    %72 = vmatpush1.msra.mxu0 0.0
    %73 = vmatprep.subr.mxu0 0.0
    %74 = vmatpush1.msra.mxu0 0.0
    %75 = vmatprep.subr.mxu0 0.0
    %76 = vmatpush1.msra.mxu0 0.0
    %77 = vmatprep.subr.mxu0 0.0
    %78 = vmatpush1.msra.mxu0 0.0
    %79 = vmatprep.subr.mxu0 0.0
    %80 = vmatpush1.msra.mxu0 0.0
    %81 = vmatprep.subr.mxu0 0.0
    %82 = vmatpush1.msra.mxu0 0.0
    %83 = vmatprep.subr.mxu0 0.0
    %84 = vmatpush1.msra.mxu0 %v55
    %85 = vmatprep.subr.mxu0 0.0
    %86 = vmatpush1.msra.mxu0 %v37
    %87 = vmatprep.subr.mxu0 0.0
    %88 = vmatpush1.msra.mxu0 %v36
    %89 = vmatprep.subr.mxu0 0.0
    %90 = vmatpush2.msra.mxu0 0.0
    %91 = vmatprep.subr.mxu0 0.0
    %92 = vmatpush2.msra.mxu0 0.0
    %93 = vmatprep.subr.mxu0 0.0
    %94 = vmatpush2.msra.mxu0 0.0
    %95 = vmatprep.subr.mxu0 0.0
    %96 = vmatpush2.msra.mxu0 0.0
    %97 = vmatprep.subr.mxu0 0.0
    %98 = vmatpush2.msra.mxu0 0.0
    %99 = vmatprep.subr.mxu0 0.0
    %100 = vmatpush2.msra.mxu0 0.0
    %101 = vmatprep.subr.mxu0 0.0
    %102 = vmatpush2.msra.mxu0 0.0
    %103 = vmatprep.subr.mxu0 0.0
    %104 = vmatpush2.msra.mxu0 0.0
    %105 = vmatprep.subr.mxu0 0.0
    %106 = vmatpush2.msra.mxu0 0.0
    %107 = vmatprep.subr.mxu0 0.0
    %108 = vmatpush2.msra.mxu0 0.0
    %109 = vmatprep.subr.mxu0 0.0
    %110 = vmatpush2.msra.mxu0 0.0
    %111 = vmatprep.subr.mxu0 0.0
    %112 = vmatpush2.msra.mxu0 0.0
    %113 = vmatprep.subr.mxu0 0.0
    %114 = vmatpush2.msra.mxu0 0.0
    %115 = vmatprep.subr.mxu0 0.0
    %116 = vmatpush2.msra.mxu0 0.0
    %117 = vmatprep.subr.mxu0 0.0
    %118 = vmatpush2.msra.mxu0 0.0
    %119 = vmatprep.subr.mxu0 0.0
    %120 = vmatpush2.msra.mxu0 0.0
    %121 = vmatprep.mubr.f32.mxu0 0.0
    %122 = vmatmul.mubr.f32.gmra.mxu0 %v48
    %v123 = vpop.f32.mrf.mxu0
    %v124 = vadd.f32 %v44, %v123
    %v125 = vpop.f32.mrf.mxu0
    %126 = vmatprep.mubr.f32.mxu0 0.0
    %127 = vmatmul.mubr.f32.gmra.mxu0 %v51
    %v128 = vpop.f32.mrf.mxu0
    %v129 = vadd.f32 %v44, %v128
    %v130 = vpop.f32.mrf.mxu0
    %131 = vdwg.mxu0
    %v132 = vmax.f32 %v124, 0.0
    %v133 = vmax.f32 %v129, 0.0
    %v134 = vld [vmem:[%s3] sm:$0xff]
    %v135 = vld [vmem:[%s3 + $0x8] sm:$0xff]
    %v136 = vld [vmem:[%s3 + $0x10] sm:$0xff]
    %v137 = vld [vmem:[%s3 + $0x18] sm:$0xff]
    %v138 = vld [vmem:[%s4] sm:$0x1]
    %v140 = vlaneseq
    %v141 = vshrl.u32 %v140, 7
    %v142 = vsub.s32 0, %v141
    %v143 = vrot.slane %v138, %v142
    %vm145 = vcmask 261120
    %v147 = vsel %vm145, %v132, 0
    %v150 = vsel %vm145, %v133, 0
    %152 = vmatprep.subr.mxu0 0.0
    %153 = vmatpush1.msra.mxu0 0.0
    %154 = vmatprep.subr.mxu0 0.0
    %155 = vmatpush1.msra.mxu0 0.0
    %156 = vmatprep.subr.mxu0 0.0
    %157 = vmatpush1.msra.mxu0 0.0
    %158 = vmatprep.subr.mxu0 0.0
    %159 = vmatpush1.msra.mxu0 0.0
    %160 = vmatprep.subr.mxu0 0.0
    %161 = vmatpush1.msra.mxu0 0.0
    %162 = vmatprep.subr.mxu0 0.0
    %163 = vmatpush1.msra.mxu0 0.0
    %164 = vmatprep.subr.mxu0 0.0
    %165 = vmatpush1.msra.mxu0 0.0
    %166 = vmatprep.subr.mxu0 0.0
    %167 = vmatpush1.msra.mxu0 0.0
    %168 = vmatprep.subr.mxu0 0.0
    %169 = vmatpush1.msra.mxu0 0.0
    %170 = vmatprep.subr.mxu0 0.0
    %171 = vmatpush1.msra.mxu0 0.0
    %172 = vmatprep.subr.mxu0 0.0
    %173 = vmatpush1.msra.mxu0 0.0
    %174 = vmatprep.subr.mxu0 0.0
    %175 = vmatpush1.msra.mxu0 0.0
    %176 = vmatprep.subr.mxu0 0.0
    %177 = vmatpush1.msra.mxu0 %v137
    %178 = vmatprep.subr.mxu0 0.0
    %179 = vmatpush1.msra.mxu0 %v136
    %180 = vmatprep.subr.mxu0 0.0
    %181 = vmatpush1.msra.mxu0 %v135
    %182 = vmatprep.subr.mxu0 0.0
    %183 = vmatpush1.msra.mxu0 %v134
    %184 = vmatprep.subr.mxu0 0.0
    %185 = vmatpush2.msra.mxu0 0.0
    %186 = vmatprep.subr.mxu0 0.0
    %187 = vmatpush2.msra.mxu0 0.0
    %188 = vmatprep.subr.mxu0 0.0
    %189 = vmatpush2.msra.mxu0 0.0
    %190 = vmatprep.subr.mxu0 0.0
    %191 = vmatpush2.msra.mxu0 0.0
    %192 = vmatprep.subr.mxu0 0.0
    %193 = vmatpush2.msra.mxu0 0.0
    %194 = vmatprep.subr.mxu0 0.0
    %195 = vmatpush2.msra.mxu0 0.0
    %196 = vmatprep.subr.mxu0 0.0
    %197 = vmatpush2.msra.mxu0 0.0
    %198 = vmatprep.subr.mxu0 0.0
    %199 = vmatpush2.msra.mxu0 0.0
    %200 = vmatprep.subr.mxu0 0.0
    %201 = vmatpush2.msra.mxu0 0.0
    %202 = vmatprep.subr.mxu0 0.0
    %203 = vmatpush2.msra.mxu0 0.0
    %204 = vmatprep.subr.mxu0 0.0
    %205 = vmatpush2.msra.mxu0 0.0
    %206 = vmatprep.subr.mxu0 0.0
    %207 = vmatpush2.msra.mxu0 0.0
    %208 = vmatprep.subr.mxu0 0.0
    %209 = vmatpush2.msra.mxu0 0.0
    %210 = vmatprep.subr.mxu0 0.0
    %211 = vmatpush2.msra.mxu0 0.0
    %212 = vmatprep.subr.mxu0 0.0
    %213 = vmatpush2.msra.mxu0 0.0
    %214 = vmatprep.subr.mxu0 0.0
    %215 = vmatpush2.msra.mxu0 0.0
    %216 = vmatprep.mubr.f32.mxu0 0.0
    %217 = vmatmul.mubr.f32.gmra.mxu0 %v147
    %v218 = vpop.f32.mrf.mxu0
    %v219 = vadd.f32 %v143, %v218
    %v220 = vpop.f32.mrf.mxu0
    %221 = vmatprep.mubr.f32.mxu0 0.0
    %222 = vmatmul.mubr.f32.gmra.mxu0 %v150
    %v223 = vpop.f32.mrf.mxu0
    %v224 = vadd.f32 %v143, %v223
    %v225 = vpop.f32.mrf.mxu0
    %226 = vdwg.mxu0
    %vm227 = vcmask 23552
    %228 = vst.msk [vmem:[%s5] sm:$0xff] %vm227, %v219
    %229 = vst.msk [vmem:[%s5 + $0x8] sm:$0xff] %vm227, %v224
    // Predicated region
    $region26: #{tpu_custom_call.1} parent=1 // pred_check
      _
    $region27: #{tpu_custom_call.1} parent=1 // pred_check_branch
      %231 = sbr.rel (0) target = $region29
    $region28: #{tpu_custom_call.1} parent=1 // pred_region
      _
    $region29: #{tpu_custom_call.1} parent=1 // pred_fallthru
      _
    // Predicated region
    $region30: #{tpu_custom_call.1} parent=1 // pred_check
      _
    $region31: #{tpu_custom_call.1} parent=1 // pred_check_branch
      %233 = sbr.rel (0) target = $region33
    $region32: #{tpu_custom_call.1} parent=1 // pred_region
      _
    $region33: #{tpu_custom_call.1} parent=1 // pred_fallthru
      _
    %234 = vsyncpa [#allocation3], 1

</llo_original>
